<compile_context>
chip_gen: v7x
topology: tpu7x:2x2x1
jax: 0.10.0
libtpu: 0.0.40
codegen_flags: <defaults>
</compile_context>

<pallas_src>
import numpy as np
import jax
import jax.numpy as jnp
from jax.experimental import pallas as pl
from jax.experimental.pallas import tpu as pltpu


def make_mlp_kernel(n_layers, p_max):
    """Pallas kernel for the full deepModel forward pass (feature-major layout).

    Refs: (xT, w0, b0, ..., w_{L-1}, b_{L-1}, outT)
      xT   : (in_dim, TM)   tile of the transposed input
      w_i  : (out_i, in_i)  PyTorch nn.Linear weight layout (VMEM-resident)
      b_i  : (out_i, 1)     bias column vector (VMEM-resident)
      outT : (out_dim, TM)  tile of the transposed output (lane-dense store)
    """
    p_max = float(p_max)

    def kernel(*refs):
        x_ref = refs[0]
        o_ref = refs[-1]

        h = x_ref[...]
        if h.dtype != jnp.float32:  # avoid a redundant full-tile cast when x is f32
            h = h.astype(jnp.float32)

        for i in range(n_layers):
            w = refs[1 + 2 * i][...]                       # (out_i, in_i)
            b = refs[2 + 2 * i][...].astype(jnp.float32)   # (out_i, 1)
            # MXU matmul with f32 accumulation; bias broadcasts along lanes.
            z = jnp.dot(w, h.astype(w.dtype),
                        preferred_element_type=jnp.float32) + b
            if i < n_layers - 1:
                # TODO(synk): nn.Dropout omitted -- identity at inference (eval mode).
                h = jnp.tanh(z)                            # activation_fun == "tanh"
            else:
                o_ref[...] = (p_max * jax.nn.sigmoid(z)).astype(o_ref.dtype)

    return kernel


def deep_model_forward(x, params, p_max, *, tm=256, weights_dtype=None):
    """x: (batch, in_dim) f32.  params: list of (W, b) with W (out, in), b (out, 1).

    tm: batch tile (multiple of 256 for v6e/v7x MXU; 128-multiples also work on v5e).
    weights_dtype: optional (e.g. jnp.bfloat16) to halve MXU passes / footprint;
                   accumulation stays f32.
    """
    batch, in_dim = x.shape
    n_layers = len(params)
    out_dim = params[-1][0].shape[0]

    if weights_dtype is not None:
        params = [(w.astype(weights_dtype), b) for (w, b) in params]

    # Lane-dense feature-major layout: batch on the 128-wide lane axis.
    padded_batch = ((batch + tm - 1) // tm) * tm
    x_t = jnp.pad(x.T, ((0, 0), (0, padded_batch - batch)))

    flat = []
    for w, b in params:
        flat.append(w)
        flat.append(b)

    grid = (padded_batch // tm,)

    in_specs = [pl.BlockSpec((in_dim, tm), lambda i: (0, i))]
    for w, b in params:
        # Full-array blocks + constant index_map -> DMA'd once, resident in VMEM.
        in_specs.append(pl.BlockSpec(w.shape, lambda i: (0, 0)))
        in_specs.append(pl.BlockSpec(b.shape, lambda i: (0, 0)))
    out_specs = pl.BlockSpec((out_dim, tm), lambda i: (0, i))

    # Advisory cost estimate for the XLA scheduler.
    flops = 2 * padded_batch * sum(int(w.shape[0]) * int(w.shape[1]) for w, _ in params)
    transcendentals = padded_batch * sum(int(w.shape[0]) for w, _ in params)
    bytes_accessed = (
        int(x_t.size) * x_t.dtype.itemsize
        + sum(int(w.size) * w.dtype.itemsize + int(b.size) * b.dtype.itemsize
              for w, b in params)
        + padded_batch * out_dim * 4
    )

    out_t = pl.pallas_call(
        make_mlp_kernel(n_layers, p_max),
        out_shape=jax.ShapeDtypeStruct((out_dim, padded_batch), jnp.float32),
        grid=grid,
        in_specs=in_specs,
        out_specs=out_specs,
        compiler_params=pltpu.CompilerParams(
            dimension_semantics=("parallel",),   # megacore sharding on v7x
        ),
        cost_estimate=pl.CostEstimate(
            flops=flops,
            transcendentals=transcendentals,
            bytes_accessed=bytes_accessed,
        ),
    )(x_t, *flat)

    return out_t[:, :batch].T


def init_params(key, config):
    """nn.Linear-style init: uniform(-1/sqrt(fan_in), 1/sqrt(fan_in)).
    W stored (out, in) (PyTorch layout), b stored (out, 1)."""
    params = []
    for i in range(len(config) - 1):
        fan_in, fan_out = int(config[i]), int(config[i + 1])
        key, kw, kb = jax.random.split(key, 3)
        bound = 1.0 / np.sqrt(fan_in)
        w = jax.random.uniform(
            kw, (fan_out, fan_in), jnp.float32, minval=-bound, maxval=bound
        )
        b = jax.random.uniform(
            kb, (fan_out, 1), jnp.float32, minval=-bound, maxval=bound
        )
        params.append((w, b))
    return params


def reference_forward(x, params, p_max):
    h = x
    for i, (w, b) in enumerate(params):
        z = h @ w.T + b.T
        if i < len(params) - 1:
            h = jnp.tanh(z)
        else:
            return p_max * jax.nn.sigmoid(z)


if __name__ == "__main__":
    # Module config (args): network_hidden_config = [32, 32], activation_fun = tanh,
    # dropout_factor irrelevant at inference, p_max = 2.0.
    input_dim = 8
    hidden_config = [32, 32]
    output_dim = 4
    p_max = 2.0
    batch = 300  # non-multiple of the tile: exercises padding + a 2-step grid

    config = [input_dim] + hidden_config + [output_dim]

    key = jax.random.PRNGKey(0)
    key, kx = jax.random.split(key)
    x = jax.random.normal(kx, (batch, input_dim), dtype=jnp.float32)

    params = init_params(key, config)

    out = jax.block_until_ready(deep_model_forward(x, params, p_max, tm=256))
    ref = jax.block_until_ready(reference_forward(x, params, p_max))

    assert out.shape == (batch, output_dim)
    np.testing.assert_allclose(np.asarray(out), np.asarray(ref), rtol=1e-4, atol=1e-5)

    print("KERNEL_OK")
</pallas_src>

<mosaic_0001>
module attributes {stable_mosaic.version = 11 : i64} {
  func.func @kernel(%arg0: i32, %arg1: memref<8x256xf32, #tpu.memory_space<vmem>>, %arg2: memref<32x8xf32, #tpu.memory_space<vmem>>, %arg3: memref<32x1xf32, #tpu.memory_space<vmem>>, %arg4: memref<32x32xf32, #tpu.memory_space<vmem>>, %arg5: memref<32x1xf32, #tpu.memory_space<vmem>>, %arg6: memref<4x32xf32, #tpu.memory_space<vmem>>, %arg7: memref<4x1xf32, #tpu.memory_space<vmem>>, %arg8: memref<4x256xf32, #tpu.memory_space<vmem>>) attributes {dimension_semantics = [#tpu.dimension_semantics<parallel>], iteration_bounds = array<i64: 2>, scalar_prefetch = 0 : i64, scratch_operands = 0 : i64, tpu.core_type = #tpu.core_type<tc>, window_params = [{transform_indices = @transform_0, window_bounds = array<i64: 8, 256>}, {pipeline_mode = #tpu.pipeline_mode<synchronous>, transform_indices = @transform_1, window_bounds = array<i64: 32, 8>}, {pipeline_mode = #tpu.pipeline_mode<synchronous>, transform_indices = @transform_2, window_bounds = array<i64: 32, 1>}, {pipeline_mode = #tpu.pipeline_mode<synchronous>, transform_indices = @transform_3, window_bounds = array<i64: 32, 32>}, {pipeline_mode = #tpu.pipeline_mode<synchronous>, transform_indices = @transform_4, window_bounds = array<i64: 32, 1>}, {pipeline_mode = #tpu.pipeline_mode<synchronous>, transform_indices = @transform_5, window_bounds = array<i64: 4, 32>}, {pipeline_mode = #tpu.pipeline_mode<synchronous>, transform_indices = @transform_6, window_bounds = array<i64: 4, 1>}, {transform_indices = @transform_7, window_bounds = array<i64: 4, 256>}]} {
    %c0 = arith.constant 0 : index
    %c0_0 = arith.constant 0 : index
    %0 = vector.load %arg1[%c0, %c0_0] : memref<8x256xf32, #tpu.memory_space<vmem>>, vector<8x256xf32>
    %c0_1 = arith.constant 0 : index
    %c0_2 = arith.constant 0 : index
    %1 = vector.load %arg2[%c0_1, %c0_2] : memref<32x8xf32, #tpu.memory_space<vmem>>, vector<32x8xf32>
    %c0_3 = arith.constant 0 : index
    %c0_4 = arith.constant 0 : index
    %2 = vector.load %arg3[%c0_3, %c0_4] : memref<32x1xf32, #tpu.memory_space<vmem>>, vector<32x1xf32>
    %cst = arith.constant dense<0.000000e+00> : vector<32x256xf32>
    %3 = tpu.matmul %1, %0, %cst {dimension_numbers = #tpu.dot_dimension_numbers<[1], [0], [0], [1], [0, 0, 1, 1], [], []>} : vector<32x8xf32>, vector<8x256xf32>, vector<32x256xf32> -> vector<32x256xf32>
    %4 = vector.broadcast %2 : vector<32x1xf32> to vector<32x256xf32>
    %5 = arith.addf %3, %4 : vector<32x256xf32>
    %6 = math.tanh %5 : vector<32x256xf32>
    %c0_5 = arith.constant 0 : index
    %c0_6 = arith.constant 0 : index
    %7 = vector.load %arg4[%c0_5, %c0_6] : memref<32x32xf32, #tpu.memory_space<vmem>>, vector<32x32xf32>
    %c0_7 = arith.constant 0 : index
    %c0_8 = arith.constant 0 : index
    %8 = vector.load %arg5[%c0_7, %c0_8] : memref<32x1xf32, #tpu.memory_space<vmem>>, vector<32x1xf32>
    %cst_9 = arith.constant dense<0.000000e+00> : vector<32x256xf32>
    %9 = tpu.matmul %7, %6, %cst_9 {dimension_numbers = #tpu.dot_dimension_numbers<[1], [0], [0], [1], [0, 0, 1, 1], [], []>} : vector<32x32xf32>, vector<32x256xf32>, vector<32x256xf32> -> vector<32x256xf32>
    %10 = vector.broadcast %8 : vector<32x1xf32> to vector<32x256xf32>
    %11 = arith.addf %9, %10 : vector<32x256xf32>
    %12 = math.tanh %11 : vector<32x256xf32>
    %c0_10 = arith.constant 0 : index
    %c0_11 = arith.constant 0 : index
    %13 = vector.load %arg6[%c0_10, %c0_11] : memref<4x32xf32, #tpu.memory_space<vmem>>, vector<4x32xf32>
    %c0_12 = arith.constant 0 : index
    %c0_13 = arith.constant 0 : index
    %14 = vector.load %arg7[%c0_12, %c0_13] : memref<4x1xf32, #tpu.memory_space<vmem>>, vector<4x1xf32>
    %cst_14 = arith.constant dense<0.000000e+00> : vector<4x256xf32>
    %15 = tpu.matmul %13, %12, %cst_14 {dimension_numbers = #tpu.dot_dimension_numbers<[1], [0], [0], [1], [0, 0, 1, 1], [], []>} : vector<4x32xf32>, vector<32x256xf32>, vector<4x256xf32> -> vector<4x256xf32>
    %16 = vector.broadcast %14 : vector<4x1xf32> to vector<4x256xf32>
    %17 = arith.addf %15, %16 : vector<4x256xf32>
    %18 = arith.negf %17 : vector<4x256xf32>
    %19 = math.exp %18 : vector<4x256xf32>
    %cst_15 = arith.constant 1.000000e+00 : f32
    %20 = vector.broadcast %cst_15 : f32 to vector<4x256xf32>
    %21 = arith.addf %20, %19 : vector<4x256xf32>
    %22 = arith.divf %20, %21 : vector<4x256xf32>
    %cst_16 = arith.constant 2.000000e+00 : f32
    %23 = vector.broadcast %cst_16 : f32 to vector<4x256xf32>
    %24 = arith.mulf %23, %22 : vector<4x256xf32>
    %c0_17 = arith.constant 0 : index
    %c0_18 = arith.constant 0 : index
    %25 = vector.load %arg8[%c0_17, %c0_18] : memref<4x256xf32, #tpu.memory_space<vmem>>, vector<4x256xf32>
    tpu.vector_store %arg8[%c0_17, %c0_18], %24 {strides = array<i32>} : memref<4x256xf32, #tpu.memory_space<vmem>>, vector<4x256xf32>,
    return
  }
  func.func @transform_0(%arg0: i32) -> (i32, i32) {
    %c0_i32 = arith.constant 0 : i32
    %c0_i32_0 = arith.constant 0 : i32
    return %c0_i32, %arg0 : i32, i32
  }
  func.func @transform_1(%arg0: i32) -> (i32, i32) {
    %c0_i32 = arith.constant 0 : i32
    %c0_i32_0 = arith.constant 0 : i32
    %c0_i32_1 = arith.constant 0 : i32
    return %c0_i32, %c0_i32_0 : i32, i32
  }
  func.func @transform_2(%arg0: i32) -> (i32, i32) {
    %c0_i32 = arith.constant 0 : i32
    %c0_i32_0 = arith.constant 0 : i32
    %c0_i32_1 = arith.constant 0 : i32
    return %c0_i32, %c0_i32_0 : i32, i32
  }
  func.func @transform_3(%arg0: i32) -> (i32, i32) {
    %c0_i32 = arith.constant 0 : i32
    %c0_i32_0 = arith.constant 0 : i32
    %c0_i32_1 = arith.constant 0 : i32
    return %c0_i32, %c0_i32_0 : i32, i32
  }
  func.func @transform_4(%arg0: i32) -> (i32, i32) {
    %c0_i32 = arith.constant 0 : i32
    %c0_i32_0 = arith.constant 0 : i32
    %c0_i32_1 = arith.constant 0 : i32
    return %c0_i32, %c0_i32_0 : i32, i32
  }
  func.func @transform_5(%arg0: i32) -> (i32, i32) {
    %c0_i32 = arith.constant 0 : i32
    %c0_i32_0 = arith.constant 0 : i32
    %c0_i32_1 = arith.constant 0 : i32
    return %c0_i32, %c0_i32_0 : i32, i32
  }
  func.func @transform_6(%arg0: i32) -> (i32, i32) {
    %c0_i32 = arith.constant 0 : i32
    %c0_i32_0 = arith.constant 0 : i32
    %c0_i32_1 = arith.constant 0 : i32
    return %c0_i32, %c0_i32_0 : i32, i32
  }
  func.func @transform_7(%arg0: i32) -> (i32, i32) {
    %c0_i32 = arith.constant 0 : i32
    %c0_i32_0 = arith.constant 0 : i32
    return %c0_i32, %arg0 : i32, i32
  }
}

</mosaic_0001>

<llo_original>
// kernel: tpu_custom_call.1
$region0: #{tpu_custom_call.1}
  #allocation0 [shape = 'u32[]', space=smem, size = 0x4, offset = 0x4, fixed_abs, tag = 'smem constant byte address 0x4 - core index']
  #allocation1 [shape = 'u32[144,128]{1,0:T(1,128)}', space=vmem, size = 0x12000, scoped, tag = 'internal scratch']
  %s0 = inlined_call_operand.vmem [shape: f32[8,512], index: 0, kind: input, shape index: {}]
  %s1 = inlined_call_operand.vmem [shape: f32[32,8], index: 1, kind: input, shape index: {}]
  %s2 = inlined_call_operand.vmem [shape: f32[32,1], index: 2, kind: input, shape index: {}]
  %s3 = inlined_call_operand.vmem [shape: f32[32,32], index: 3, kind: input, shape index: {}]
  %s4 = inlined_call_operand.vmem [shape: f32[32,1], index: 4, kind: input, shape index: {}]
  %s5 = inlined_call_operand.vmem [shape: f32[4,32], index: 5, kind: input, shape index: {}]
  %s6 = inlined_call_operand.vmem [shape: f32[4,1], index: 6, kind: input, shape index: {}]
  %s7 = inlined_call_operand.hbm [shape: f32[4,512], index: 7, kind: output, shape index: {}]
  %s8 = sld [smem:[#allocation0]]
  $region61: #{tpu_custom_call.1} parent=0
    _
  %s10 = ssub.s32 1, %s8
  %s11 = scalar_select 0, %s10, %s8
  $region1: #{tpu_custom_call.1} parent=0
    #allocation2 [shape = 'u8[8192]{0}', space=vmem, size = 0x2000, scoped, tag = 'output window, operand 0']
    #allocation3 [shape = 's32[2]{0}', space=sflag, size = 0x8, scoped, tag = 'scoped memory for tpu_custom_call.1']
    %12 = vsyncpa [#allocation3], 0
    %s13 = scalar_lea.sflag [#allocation3], 1
    %14 = vsyncpa %s13, 0
    loop: start=0, step=1, limit=4
    $region2: #{tpu_custom_call.1} parent=1 // loop_pre_header
      _
    $region3: #{tpu_custom_call.1} parent=1 // loop_header
      %s16 = sphi 0, %s20
      %p17 = scmp.ge.s32.totalorder %s16, 4
      %s26 = sphi 0, %s28
      %s29 = sphi 0, %s26
      %s30 = sphi 0, %s29
      %s46 = sphi 0, %s30
      %s50 = sphi 0, %s50
      %s52 = sphi 0, %s50
      %s53 = sphi 0, %s52
      %s67 = sphi 0, %s53
      %s71 = sphi 0, %s71
      %s73 = sphi 0, %s71
      %s74 = sphi 0, %s73
      %s88 = sphi 0, %s74
      %s92 = sphi 0, %s92
      %s94 = sphi 0, %s92
      %s95 = sphi 0, %s94
      %s109 = sphi 0, %s95
      %s113 = sphi 0, %s113
      %s115 = sphi 0, %s113
      %s116 = sphi 0, %s115
      %s130 = sphi 0, %s116
      %s134 = sphi 0, %s134
      %s136 = sphi 0, %s134
      %s137 = sphi 0, %s136
      %s151 = sphi 0, %s137
      %s155 = sphi 0, %s155
      %s157 = sphi 0, %s155
      %s158 = sphi 0, %s157
      %s172 = sphi 0, %s158
      %s178 = sphi 0, %s180
      %s181 = sphi 0, %s178
      %s182 = sphi 0, %s181
      %s198 = sphi 0, %s182
    $region4: #{tpu_custom_call.1} parent=1 // loop_header_branch
      %19 = sbr.rel (%p17) target = $region8
    $region5: #{tpu_custom_call.1} parent=1 // loop_body
      %s21 = ssub.s32 %s16, 1
      %s22 = ssub.s32 %s16, 2
      %s23 = sadd.s32 %s16, 1
      %s24 = ssub.s32 %s16, %s23
      %p25 = scmp.eq.s32.totalorder %s24, 0
      %s27 = sadd.s32 %s26, 1
      %s28 = scalar_select %p25, %s26, %s27
      %p31 = pneg %p25
      %p32 = scmp.eq.s32.totalorder %s16, 1
      %p33 = por %p31, %p32
      %p34 = scmp.ne.s32.totalorder %s26, %s29
      %p35 = scmp.eq.s32.totalorder %s16, 0
      %p36 = por %p34, %p35
      %p37 = scmp.ne.s32.totalorder %s26, %s29
      %p38 = scmp.eq.s32.totalorder %s21, 1
      %p39 = por %p37, %p38
      %p40 = scmp.ne.s32.totalorder %s29, %s30
      %p41 = scmp.eq.s32.totalorder %s21, 0
      %p42 = por %p40, %p41
      %p43 = scmp.ne.s32.totalorder %s29, %s30
      %p44 = scmp.eq.s32.totalorder %s22, 1
      %p45 = por %p43, %p44
      %p47 = scmp.ne.s32.totalorder %s30, %s46
      %p48 = scmp.eq.s32.totalorder %s22, 0
      %p49 = por %p47, %p48
      %s51 = sadd.s32 %s50, 1
      %p54 = scmp.eq.s32.totalorder %s16, 1
      %p55 = scmp.ne.s32.totalorder %s50, %s52
      %p56 = scmp.eq.s32.totalorder %s16, 0
      %p57 = por %p55, %p56
      %p58 = scmp.ne.s32.totalorder %s50, %s52
      %p59 = scmp.eq.s32.totalorder %s21, 1
      %p60 = por %p58, %p59
      %p61 = scmp.ne.s32.totalorder %s52, %s53
      %p62 = scmp.eq.s32.totalorder %s21, 0
      %p63 = por %p61, %p62
      %p64 = scmp.ne.s32.totalorder %s52, %s53
      %p65 = scmp.eq.s32.totalorder %s22, 1
      %p66 = por %p64, %p65
      %p68 = scmp.ne.s32.totalorder %s53, %s67
      %p69 = scmp.eq.s32.totalorder %s22, 0
      %p70 = por %p68, %p69
      %s72 = sadd.s32 %s71, 1
      %p75 = scmp.eq.s32.totalorder %s16, 1
      %p76 = scmp.ne.s32.totalorder %s71, %s73
      %p77 = scmp.eq.s32.totalorder %s16, 0
      %p78 = por %p76, %p77
      %p79 = scmp.ne.s32.totalorder %s71, %s73
      %p80 = scmp.eq.s32.totalorder %s21, 1
      %p81 = por %p79, %p80
      %p82 = scmp.ne.s32.totalorder %s73, %s74
      %p83 = scmp.eq.s32.totalorder %s21, 0
      %p84 = por %p82, %p83
      %p85 = scmp.ne.s32.totalorder %s73, %s74
      %p86 = scmp.eq.s32.totalorder %s22, 1
      %p87 = por %p85, %p86
      %p89 = scmp.ne.s32.totalorder %s74, %s88
      %p90 = scmp.eq.s32.totalorder %s22, 0
      %p91 = por %p89, %p90
      %s93 = sadd.s32 %s92, 1
      %p96 = scmp.eq.s32.totalorder %s16, 1
      %p97 = scmp.ne.s32.totalorder %s92, %s94
      %p98 = scmp.eq.s32.totalorder %s16, 0
      %p99 = por %p97, %p98
      %p100 = scmp.ne.s32.totalorder %s92, %s94
      %p101 = scmp.eq.s32.totalorder %s21, 1
      %p102 = por %p100, %p101
      %p103 = scmp.ne.s32.totalorder %s94, %s95
      %p104 = scmp.eq.s32.totalorder %s21, 0
      %p105 = por %p103, %p104
      %p106 = scmp.ne.s32.totalorder %s94, %s95
      %p107 = scmp.eq.s32.totalorder %s22, 1
      %p108 = por %p106, %p107
      %p110 = scmp.ne.s32.totalorder %s95, %s109
      %p111 = scmp.eq.s32.totalorder %s22, 0
      %p112 = por %p110, %p111
      %s114 = sadd.s32 %s113, 1
      %p117 = scmp.eq.s32.totalorder %s16, 1
      %p118 = scmp.ne.s32.totalorder %s113, %s115
      %p119 = scmp.eq.s32.totalorder %s16, 0
      %p120 = por %p118, %p119
      %p121 = scmp.ne.s32.totalorder %s113, %s115
      %p122 = scmp.eq.s32.totalorder %s21, 1
      %p123 = por %p121, %p122
      %p124 = scmp.ne.s32.totalorder %s115, %s116
      %p125 = scmp.eq.s32.totalorder %s21, 0
      %p126 = por %p124, %p125
      %p127 = scmp.ne.s32.totalorder %s115, %s116
      %p128 = scmp.eq.s32.totalorder %s22, 1
      %p129 = por %p127, %p128
      %p131 = scmp.ne.s32.totalorder %s116, %s130
      %p132 = scmp.eq.s32.totalorder %s22, 0
      %p133 = por %p131, %p132
      %s135 = sadd.s32 %s134, 1
      %p138 = scmp.eq.s32.totalorder %s16, 1
      %p139 = scmp.ne.s32.totalorder %s134, %s136
      %p140 = scmp.eq.s32.totalorder %s16, 0
      %p141 = por %p139, %p140
      %p142 = scmp.ne.s32.totalorder %s134, %s136
      %p143 = scmp.eq.s32.totalorder %s21, 1
      %p144 = por %p142, %p143
      %p145 = scmp.ne.s32.totalorder %s136, %s137
      %p146 = scmp.eq.s32.totalorder %s21, 0
      %p147 = por %p145, %p146
      %p148 = scmp.ne.s32.totalorder %s136, %s137
      %p149 = scmp.eq.s32.totalorder %s22, 1
      %p150 = por %p148, %p149
      %p152 = scmp.ne.s32.totalorder %s137, %s151
      %p153 = scmp.eq.s32.totalorder %s22, 0
      %p154 = por %p152, %p153
      %s156 = sadd.s32 %s155, 1
      %p159 = scmp.eq.s32.totalorder %s16, 1
      %p160 = scmp.ne.s32.totalorder %s155, %s157
      %p161 = scmp.eq.s32.totalorder %s16, 0
      %p162 = por %p160, %p161
      %p163 = scmp.ne.s32.totalorder %s155, %s157
      %p164 = scmp.eq.s32.totalorder %s21, 1
      %p165 = por %p163, %p164
      %p166 = scmp.ne.s32.totalorder %s157, %s158
      %p167 = scmp.eq.s32.totalorder %s21, 0
      %p168 = por %p166, %p167
      %p169 = scmp.ne.s32.totalorder %s157, %s158
      %p170 = scmp.eq.s32.totalorder %s22, 1
      %p171 = por %p169, %p170
      %p173 = scmp.ne.s32.totalorder %s158, %s172
      %p174 = scmp.eq.s32.totalorder %s22, 0
      %p175 = por %p173, %p174
      %s176 = ssub.s32 %s16, %s23
      %p177 = scmp.eq.s32.totalorder %s176, 0
      %s179 = sadd.s32 %s178, 1
      %s180 = scalar_select %p177, %s178, %s179
      %p183 = pneg %p177
      %p184 = scmp.eq.s32.totalorder %s16, 1
      %p185 = por %p183, %p184
      %p186 = scmp.ne.s32.totalorder %s178, %s181
      %p187 = scmp.eq.s32.totalorder %s16, 0
      %p188 = por %p186, %p187
      %p189 = scmp.ne.s32.totalorder %s178, %s181
      %p190 = scmp.eq.s32.totalorder %s21, 1
      %p191 = por %p189, %p190
      %p192 = scmp.ne.s32.totalorder %s181, %s182
      %p193 = scmp.eq.s32.totalorder %s21, 0
      %p194 = por %p192, %p193
      %p195 = scmp.ne.s32.totalorder %s181, %s182
      %p196 = scmp.eq.s32.totalorder %s22, 1
      %p197 = por %p195, %p196
      %p199 = scmp.ne.s32.totalorder %s182, %s198
      %p200 = scmp.eq.s32.totalorder %s22, 0
      %p201 = por %p199, %p200
      %p202 = scmp.le.s32.totalorder 1, %s16
      %p203 = scmp.lt.s32.totalorder %s16, 3
      %p204 = pnand %p202, %p203
      %p205 = pneg %p204
      // Predicated region
      $region9: #{tpu_custom_call.1} parent=5 // pred_check
        _
      $region10: #{tpu_custom_call.1} parent=5 // pred_check_branch
        %207 = sbr.rel (%p204) target = $region12
      $region11: #{tpu_custom_call.1} parent=5 // pred_region
        %s208 = ssub.s32 %s16, 1
        // Predicated region
        $region13: #{tpu_custom_call.1} parent=11 // pred_check
          %p209 = pneg %p63
        $region14: #{tpu_custom_call.1} parent=11 // pred_check_branch
          %211 = sbr.rel (%p209) target = $region16
        $region15: #{tpu_custom_call.1} parent=11 // pred_region
          _
        $region16: #{tpu_custom_call.1} parent=11 // pred_fallthru
          _
        // Predicated region
        $region17: #{tpu_custom_call.1} parent=11 // pred_check
          %p212 = pneg %p84
        $region18: #{tpu_custom_call.1} parent=11 // pred_check_branch
          %214 = sbr.rel (%p212) target = $region20
        $region19: #{tpu_custom_call.1} parent=11 // pred_region
          _
        $region20: #{tpu_custom_call.1} parent=11 // pred_fallthru
          _
        // Predicated region
        $region21: #{tpu_custom_call.1} parent=11 // pred_check
          %p215 = pneg %p105
        $region22: #{tpu_custom_call.1} parent=11 // pred_check_branch
          %217 = sbr.rel (%p215) target = $region24
        $region23: #{tpu_custom_call.1} parent=11 // pred_region
          _
        $region24: #{tpu_custom_call.1} parent=11 // pred_fallthru
          _
        // Predicated region
        $region25: #{tpu_custom_call.1} parent=11 // pred_check
          %p218 = pneg %p126
        $region26: #{tpu_custom_call.1} parent=11 // pred_check_branch
          %220 = sbr.rel (%p218) target = $region28
        $region27: #{tpu_custom_call.1} parent=11 // pred_region
          _
        $region28: #{tpu_custom_call.1} parent=11 // pred_fallthru
          _
        // Predicated region
        $region29: #{tpu_custom_call.1} parent=11 // pred_check
          %p221 = pneg %p147
        $region30: #{tpu_custom_call.1} parent=11 // pred_check_branch
          %223 = sbr.rel (%p221) target = $region32
        $region31: #{tpu_custom_call.1} parent=11 // pred_region
          _
        $region32: #{tpu_custom_call.1} parent=11 // pred_fallthru
          _
        // Predicated region
        $region33: #{tpu_custom_call.1} parent=11 // pred_check
          %p224 = pneg %p168
        $region34: #{tpu_custom_call.1} parent=11 // pred_check_branch
          %226 = sbr.rel (%p224) target = $region36
        $region35: #{tpu_custom_call.1} parent=11 // pred_region
          _
        $region36: #{tpu_custom_call.1} parent=11 // pred_fallthru
          _
      $region12: #{tpu_custom_call.1} parent=5 // pred_fallthru
        _
      %p227 = scmp.lt.s32.totalorder %s16, 2
      // Predicated region
      $region37: #{tpu_custom_call.1} parent=5 // pred_check
        %p228 = pneg %p227
      $region38: #{tpu_custom_call.1} parent=5 // pred_check_branch
        %230 = sbr.rel (%p228) target = $region40
      $region39: #{tpu_custom_call.1} parent=5 // pred_region
        // Predicated region
        $region41: #{tpu_custom_call.1} parent=39 // pred_check
          %p231 = pneg %p36
        $region42: #{tpu_custom_call.1} parent=39 // pred_check_branch
          %233 = sbr.rel (%p231) target = $region44
        $region43: #{tpu_custom_call.1} parent=39 // pred_region
          %s234 = smul.u32 2, %s16
          %p235 = scmp.lt.s32.totalorder %s234, 3
          %s236 = scalar_select %p235, %s234, 3
          %s237 = smul.addr %s236, 8
          %s238 = scalar_lea.vmem %s0, %s237
          %s239 = smul.u32 2, %s16
        $region44: #{tpu_custom_call.1} parent=39 // pred_fallthru
          _
      $region40: #{tpu_custom_call.1} parent=5 // pred_fallthru
        _
      %p240 = scmp.le.s32.totalorder 1, %s16
      %p241 = scmp.lt.s32.totalorder %s16, 3
      %p242 = pnand %p240, %p241
      %p243 = pneg %p242
      // Predicated region
      $region45: #{tpu_custom_call.1} parent=5 // pred_check
        _
      $region46: #{tpu_custom_call.1} parent=5 // pred_check_branch
        %245 = sbr.rel (%p242) target = $region48
      $region47: #{tpu_custom_call.1} parent=5 // pred_region
        %s246 = ssub.s32 %s16, 1
        %s247 = smul.u32 2, %s21
        %p248 = scmp.lt.s32.totalorder %s247, 3
        %s249 = scalar_select %p248, %s247, 3
        %s250 = smul.addr %s249, 8
        %s251 = scalar_lea.vmem %s0, %s250
        %p252 = pneg %p42
        %p253 = pneg %p39
        %p254 = pneg %p63
        %p255 = pneg %p60
        %p256 = pneg %p84
        %p257 = pneg %p81
        %p258 = pneg %p105
        %p259 = pneg %p102
        %p260 = pneg %p126
        %p261 = pneg %p123
        %p262 = pneg %p147
        %p263 = pneg %p144
        %p264 = pneg %p168
        %p265 = pneg %p165
        %p266 = pneg %p194
        %p267 = pneg %p191
        %s268 = sand.u32 %s181, 1
        %s269 = scalar_lea.sflag [#allocation3], %s268
        %s270 = sand.u32 %s181, 1
        %s271 = smul.addr %s270, 8
        %s272 = scalar_lea.vmem [#allocation2], %s271
        %s273 = smul.u32 2, %s21
        %p274 = scmp.lt.s32.totalorder %s273, 3
        %s275 = scalar_select %p274, %s273, 3
        %s276 = smul.addr %s275, 8
        %s277 = scalar_lea.vmem %s0, %s276
        %s278 = smul.u32 2, %s21
        %s279 = smul.u32 2, %s21
        %v280 = vld [vmem:[%s277] sm:$0xff]
        %v281 = vld [vmem:[%s277 + $0x8] sm:$0xff]
        %v282 = vld [vmem:[%s1] sm:$0xff]
        %v283 = vld [vmem:[%s1 + $0x8] sm:$0xff]
        %v284 = vld [vmem:[%s1 + $0x10] sm:$0xff]
        %v285 = vld [vmem:[%s1 + $0x18] sm:$0xff]
        %v286 = vld [vmem:[%s2] sm:$0xff]
        %v287 = vld [vmem:[%s2 + $0x8] sm:$0xff]
        %v288 = vld [vmem:[%s2 + $0x10] sm:$0xff]
        %v289 = vld [vmem:[%s2 + $0x18] sm:$0xff]
        %291 = vset.pattern.permute.xlu0 0
        %292 = vperm.xlu0 %291, %v286
        %v293 = vpop.permute.xlu0 %292
        %296 = vset.pattern.permute.xlu0 0
        %297 = vperm.xlu0 %296, %v287
        %v298 = vpop.permute.xlu0 %297
        %301 = vset.pattern.permute.xlu0 0
        %302 = vperm.xlu0 %301, %v288
        %v303 = vpop.permute.xlu0 %302
        %306 = vset.pattern.permute.xlu0 0
        %307 = vperm.xlu0 %306, %v289
        %v308 = vpop.permute.xlu0 %307
        %vm310 = vcmask 64512
        %v312 = vsel %vm310, %v282, 0
        %v315 = vsel %vm310, %v283, 0
        %v318 = vsel %vm310, %v284, 0
        %v321 = vsel %vm310, %v285, 0
        %323 = vmatprep.subr.mxu0 %v281
        %324 = vmatpush1.msra.mxu0 %v280
        %325 = vmatprep.subr.mxu0 0.0
        %326 = vmatpush1.msra.mxu0 0.0
        %327 = vmatprep.subr.mxu0 0.0
        %328 = vmatpush1.msra.mxu0 0.0
        %329 = vmatprep.subr.mxu0 0.0
        %330 = vmatpush1.msra.mxu0 0.0
        %331 = vmatprep.subr.mxu0 0.0
        %332 = vmatpush1.msra.mxu0 0.0
        %333 = vmatprep.subr.mxu0 0.0
        %334 = vmatpush1.msra.mxu0 0.0
        %335 = vmatprep.subr.mxu0 0.0
        %336 = vmatpush1.msra.mxu0 0.0
        %337 = vmatprep.subr.mxu0 0.0
        %338 = vmatpush1.msra.mxu0 0.0
        %339 = vmatprep.subr.mxu0 0.0
        %340 = vmatpush1.msra.mxu0 0.0
        %341 = vmatprep.subr.mxu0 0.0
        %342 = vmatpush1.msra.mxu0 0.0
        %343 = vmatprep.subr.mxu0 0.0
        %344 = vmatpush1.msra.mxu0 0.0
        %345 = vmatprep.subr.mxu0 0.0
        %346 = vmatpush1.msra.mxu0 0.0
        %347 = vmatprep.subr.mxu0 0.0
        %348 = vmatpush1.msra.mxu0 0.0
        %349 = vmatprep.subr.mxu0 0.0
        %350 = vmatpush1.msra.mxu0 0.0
        %351 = vmatprep.subr.mxu0 0.0
        %352 = vmatpush1.msra.mxu0 0.0
        %353 = vmatprep.subr.mxu0 0.0
        %354 = vmatpush1.msra.mxu0 0.0
        %355 = vmatprep.subr.mxu0 0.0
        %356 = vmatpush1.msra.mxu0 0.0
        %357 = vmatprep.subr.mxu0 0.0
        %358 = vmatpush1.msra.mxu0 0.0
        %359 = vmatprep.subr.mxu0 0.0
        %360 = vmatpush1.msra.mxu0 0.0
        %361 = vmatprep.subr.mxu0 0.0
        %362 = vmatpush1.msra.mxu0 0.0
        %363 = vmatprep.subr.mxu0 0.0
        %364 = vmatpush1.msra.mxu0 0.0
        %365 = vmatprep.subr.mxu0 0.0
        %366 = vmatpush1.msra.mxu0 0.0
        %367 = vmatprep.subr.mxu0 0.0
        %368 = vmatpush1.msra.mxu0 0.0
        %369 = vmatprep.subr.mxu0 0.0
        %370 = vmatpush1.msra.mxu0 0.0
        %371 = vmatprep.subr.mxu0 0.0
        %372 = vmatpush1.msra.mxu0 0.0
        %373 = vmatprep.subr.mxu0 0.0
        %374 = vmatpush1.msra.mxu0 0.0
        %375 = vmatprep.subr.mxu0 0.0
        %376 = vmatpush1.msra.mxu0 0.0
        %377 = vmatprep.subr.mxu0 0.0
        %378 = vmatpush1.msra.mxu0 0.0
        %379 = vmatprep.subr.mxu0 0.0
        %380 = vmatpush1.msra.mxu0 0.0
        %381 = vmatprep.subr.mxu0 0.0
        %382 = vmatpush1.msra.mxu0 0.0
        %383 = vmatprep.subr.mxu0 0.0
        %384 = vmatpush1.msra.mxu0 0.0
        %385 = vmatprep.subr.mxu0 0.0
        %386 = vmatpush1.msra.mxu0 0.0
        %387 = vmatprep.mubr.f32.mxu0 0.0
        %388 = vmatmul.mubr.f32.gmra.mrb[0].mxu0 %v312
        %v389 = vpop.f32.mrb[0].mxu0
        %v390 = vadd.f32 %v293, %v389
        %v391 = vpop.f32.mrb[0].mxu0
        %v392 = vadd.f32 %v293, %v391
        %393 = vmatprep.mubr.f32.mxu0 0.0
        %394 = vmatmul.mubr.f32.gmra.mrb[0].mxu0 %v315
        %v395 = vpop.f32.mrb[0].mxu0
        %v396 = vadd.f32 %v298, %v395
        %v397 = vpop.f32.mrb[0].mxu0
        %v398 = vadd.f32 %v298, %v397
        %399 = vmatprep.mubr.f32.mxu0 0.0
        %400 = vmatmul.mubr.f32.gmra.mrb[0].mxu0 %v318
        %v401 = vpop.f32.mrb[0].mxu0
        %v402 = vadd.f32 %v303, %v401
        %v403 = vpop.f32.mrb[0].mxu0
        %v404 = vadd.f32 %v303, %v403
        %405 = vmatprep.mubr.f32.mxu0 0.0
        %406 = vmatmul.mubr.f32.gmra.mrb[0].mxu0 %v321
        %v407 = vpop.f32.mrb[0].mxu0
        %v408 = vadd.f32 %v308, %v407
        %v409 = vpop.f32.mrb[0].mxu0
        %v410 = vadd.f32 %v308, %v409
        %411 = vdwg.mxu0
        %v412 = vtanh.pop %v390
        %v413 = vtanh.pop %v392
        %v414 = vtanh.pop %v396
        %v415 = vtanh.pop %v398
        %v416 = vtanh.pop %v402
        %v417 = vtanh.pop %v404
        %v418 = vtanh.pop %v408
        %v419 = vtanh.pop %v410
        %v420 = vld [vmem:[%s3] sm:$0xff]
        %v421 = vld [vmem:[%s3 + $0x8] sm:$0xff]
        %v422 = vld [vmem:[%s3 + $0x10] sm:$0xff]
        %v423 = vld [vmem:[%s3 + $0x18] sm:$0xff]
        %v424 = vld [vmem:[%s4] sm:$0xff]
        %v425 = vld [vmem:[%s4 + $0x8] sm:$0xff]
        %v426 = vld [vmem:[%s4 + $0x10] sm:$0xff]
        %v427 = vld [vmem:[%s4 + $0x18] sm:$0xff]
        %429 = vset.pattern.permute.xlu0 0
        %430 = vperm.xlu0 %429, %v424
        %v431 = vpop.permute.xlu0 %430
        %434 = vset.pattern.permute.xlu0 0
        %435 = vperm.xlu0 %434, %v425
        %v436 = vpop.permute.xlu0 %435
        %439 = vset.pattern.permute.xlu0 0
        %440 = vperm.xlu0 %439, %v426
        %v441 = vpop.permute.xlu0 %440
        %444 = vset.pattern.permute.xlu0 0
        %445 = vperm.xlu0 %444, %v427
        %v446 = vpop.permute.xlu0 %445
        %vm448 = vcmask 261120
        %v450 = vsel %vm448, %v420, 0
        %v453 = vsel %vm448, %v421, 0
        %v456 = vsel %vm448, %v422, 0
        %v459 = vsel %vm448, %v423, 0
        %461 = vmatprep.subr.mxu0 %v413
        %462 = vmatpush1.msra.mxu0 %v412
        %463 = vmatprep.subr.mxu0 %v415
        %464 = vmatpush1.msra.mxu0 %v414
        %465 = vmatprep.subr.mxu0 %v417
        %466 = vmatpush1.msra.mxu0 %v416
        %467 = vmatprep.subr.mxu0 %v419
        %468 = vmatpush1.msra.mxu0 %v418
        %469 = vmatprep.subr.mxu0 0.0
        %470 = vmatpush1.msra.mxu0 0.0
        %471 = vmatprep.subr.mxu0 0.0
        %472 = vmatpush1.msra.mxu0 0.0
        %473 = vmatprep.subr.mxu0 0.0
        %474 = vmatpush1.msra.mxu0 0.0
        %475 = vmatprep.subr.mxu0 0.0
        %476 = vmatpush1.msra.mxu0 0.0
        %477 = vmatprep.subr.mxu0 0.0
        %478 = vmatpush1.msra.mxu0 0.0
        %479 = vmatprep.subr.mxu0 0.0
        %480 = vmatpush1.msra.mxu0 0.0
        %481 = vmatprep.subr.mxu0 0.0
        %482 = vmatpush1.msra.mxu0 0.0
        %483 = vmatprep.subr.mxu0 0.0
        %484 = vmatpush1.msra.mxu0 0.0
        %485 = vmatprep.subr.mxu0 0.0
        %486 = vmatpush1.msra.mxu0 0.0
        %487 = vmatprep.subr.mxu0 0.0
        %488 = vmatpush1.msra.mxu0 0.0
        %489 = vmatprep.subr.mxu0 0.0
        %490 = vmatpush1.msra.mxu0 0.0
        %491 = vmatprep.subr.mxu0 0.0
        %492 = vmatpush1.msra.mxu0 0.0
        %493 = vmatprep.subr.mxu0 0.0
        %494 = vmatpush1.msra.mxu0 0.0
        %495 = vmatprep.subr.mxu0 0.0
        %496 = vmatpush1.msra.mxu0 0.0
        %497 = vmatprep.subr.mxu0 0.0
        %498 = vmatpush1.msra.mxu0 0.0
        %499 = vmatprep.subr.mxu0 0.0
        %500 = vmatpush1.msra.mxu0 0.0
        %501 = vmatprep.subr.mxu0 0.0
        %502 = vmatpush1.msra.mxu0 0.0
        %503 = vmatprep.subr.mxu0 0.0
        %504 = vmatpush1.msra.mxu0 0.0
        %505 = vmatprep.subr.mxu0 0.0
        %506 = vmatpush1.msra.mxu0 0.0
        %507 = vmatprep.subr.mxu0 0.0
        %508 = vmatpush1.msra.mxu0 0.0
        %509 = vmatprep.subr.mxu0 0.0
        %510 = vmatpush1.msra.mxu0 0.0
        %511 = vmatprep.subr.mxu0 0.0
        %512 = vmatpush1.msra.mxu0 0.0
        %513 = vmatprep.subr.mxu0 0.0
        %514 = vmatpush1.msra.mxu0 0.0
        %515 = vmatprep.subr.mxu0 0.0
        %516 = vmatpush1.msra.mxu0 0.0
        %517 = vmatprep.subr.mxu0 0.0
        %518 = vmatpush1.msra.mxu0 0.0
        %519 = vmatprep.subr.mxu0 0.0
        %520 = vmatpush1.msra.mxu0 0.0
        %521 = vmatprep.subr.mxu0 0.0
        %522 = vmatpush1.msra.mxu0 0.0
        %523 = vmatprep.subr.mxu0 0.0
        %524 = vmatpush1.msra.mxu0 0.0
        %525 = vmatprep.mubr.f32.mxu0 0.0
        %526 = vmatmul.mubr.f32.gmra.mrb[0].mxu0 %v450
        %v527 = vpop.f32.mrb[0].mxu0
        %v528 = vadd.f32 %v431, %v527
        %v529 = vpop.f32.mrb[0].mxu0
        %v530 = vadd.f32 %v431, %v529
        %531 = vmatprep.mubr.f32.mxu0 0.0
        %532 = vmatmul.mubr.f32.gmra.mrb[0].mxu0 %v453
        %v533 = vpop.f32.mrb[0].mxu0
        %v534 = vadd.f32 %v436, %v533
        %v535 = vpop.f32.mrb[0].mxu0
        %v536 = vadd.f32 %v436, %v535
        %537 = vmatprep.mubr.f32.mxu0 0.0
        %538 = vmatmul.mubr.f32.gmra.mrb[0].mxu0 %v456
        %v539 = vpop.f32.mrb[0].mxu0
        %v540 = vadd.f32 %v441, %v539
        %v541 = vpop.f32.mrb[0].mxu0
        %v542 = vadd.f32 %v441, %v541
        %543 = vmatprep.mubr.f32.mxu0 0.0
        %544 = vmatmul.mubr.f32.gmra.mrb[0].mxu0 %v459
        %v545 = vpop.f32.mrb[0].mxu0
        %v546 = vadd.f32 %v446, %v545
        %v547 = vpop.f32.mrb[0].mxu0
        %v548 = vadd.f32 %v446, %v547
        %549 = vdwg.mxu0
        %v550 = vtanh.pop %v528
        %v551 = vtanh.pop %v530
        %v552 = vtanh.pop %v534
        %v553 = vtanh.pop %v536
        %v554 = vtanh.pop %v540
        %v555 = vtanh.pop %v542
        %v556 = vtanh.pop %v546
        %v557 = vtanh.pop %v548
        %v558 = vld [vmem:[%s5] sm:$0xf]
        %v559 = vld [vmem:[%s6] sm:$0xf]
        %561 = vset.pattern.permute.xlu0 0
        %562 = vperm.xlu0 %561, %v559
        %v563 = vpop.permute.xlu0 %562
        %v566 = vsel %vm448, %v558, 0
        %568 = vmatprep.subr.mxu0 %v551
        %569 = vmatpush1.msra.mxu0 %v550
        %570 = vmatprep.subr.mxu0 %v553
        %571 = vmatpush1.msra.mxu0 %v552
        %572 = vmatprep.subr.mxu0 %v555
        %573 = vmatpush1.msra.mxu0 %v554
        %574 = vmatprep.subr.mxu0 %v557
        %575 = vmatpush1.msra.mxu0 %v556
        %576 = vmatprep.subr.mxu0 0.0
        %577 = vmatpush1.msra.mxu0 0.0
        %578 = vmatprep.subr.mxu0 0.0
        %579 = vmatpush1.msra.mxu0 0.0
        %580 = vmatprep.subr.mxu0 0.0
        %581 = vmatpush1.msra.mxu0 0.0
        %582 = vmatprep.subr.mxu0 0.0
        %583 = vmatpush1.msra.mxu0 0.0
        %584 = vmatprep.subr.mxu0 0.0
        %585 = vmatpush1.msra.mxu0 0.0
        %586 = vmatprep.subr.mxu0 0.0
        %587 = vmatpush1.msra.mxu0 0.0
        %588 = vmatprep.subr.mxu0 0.0
        %589 = vmatpush1.msra.mxu0 0.0
        %590 = vmatprep.subr.mxu0 0.0
        %591 = vmatpush1.msra.mxu0 0.0
        %592 = vmatprep.subr.mxu0 0.0
        %593 = vmatpush1.msra.mxu0 0.0
        %594 = vmatprep.subr.mxu0 0.0
        %595 = vmatpush1.msra.mxu0 0.0
        %596 = vmatprep.subr.mxu0 0.0
        %597 = vmatpush1.msra.mxu0 0.0
        %598 = vmatprep.subr.mxu0 0.0
        %599 = vmatpush1.msra.mxu0 0.0
        %600 = vmatprep.subr.mxu0 0.0
        %601 = vmatpush1.msra.mxu0 0.0
        %602 = vmatprep.subr.mxu0 0.0
        %603 = vmatpush1.msra.mxu0 0.0
        %604 = vmatprep.subr.mxu0 0.0
        %605 = vmatpush1.msra.mxu0 0.0
        %606 = vmatprep.subr.mxu0 0.0
        %607 = vmatpush1.msra.mxu0 0.0
        %608 = vmatprep.subr.mxu0 0.0
        %609 = vmatpush1.msra.mxu0 0.0
        %610 = vmatprep.subr.mxu0 0.0
        %611 = vmatpush1.msra.mxu0 0.0
        %612 = vmatprep.subr.mxu0 0.0
        %613 = vmatpush1.msra.mxu0 0.0
        %614 = vmatprep.subr.mxu0 0.0
        %615 = vmatpush1.msra.mxu0 0.0
        %616 = vmatprep.subr.mxu0 0.0
        %617 = vmatpush1.msra.mxu0 0.0
        %618 = vmatprep.subr.mxu0 0.0
        %619 = vmatpush1.msra.mxu0 0.0
        %620 = vmatprep.subr.mxu0 0.0
        %621 = vmatpush1.msra.mxu0 0.0
        %622 = vmatprep.subr.mxu0 0.0
        %623 = vmatpush1.msra.mxu0 0.0
        %624 = vmatprep.subr.mxu0 0.0
        %625 = vmatpush1.msra.mxu0 0.0
        %626 = vmatprep.subr.mxu0 0.0
        %627 = vmatpush1.msra.mxu0 0.0
        %628 = vmatprep.subr.mxu0 0.0
        %629 = vmatpush1.msra.mxu0 0.0
        %630 = vmatprep.subr.mxu0 0.0
        %631 = vmatpush1.msra.mxu0 0.0
        %632 = vmatprep.mubr.f32.mxu0 0.0
        %633 = vmatmul.mubr.f32.gmra.mrb[0].mxu0 %v566
        %v634 = vpop.f32.mrb[0].mxu0
        %v635 = vadd.f32 %v563, %v634
        %v636 = vpop.f32.mrb[0].mxu0
        %v637 = vadd.f32 %v563, %v636
        %638 = vdwg.mxu0
        %v639 = vxor.u32 %v635, 2147483648
        %v640 = vxor.u32 %v637, 2147483648
        %v641 = vmul.f32 %v639, 1.442695
        %v642 = vpow.pop %v641
        %v643 = vmul.f32 %v640, 1.442695
        %v644 = vpow.pop %v643
        %v645 = vadd.f32 %v642, 1.0
        %v646 = vadd.f32 %v644, 1.0
        %v647 = vrcp.pop %v645
        %v648 = vmul.f32 1.0, %v647
        %v649 = vrcp.pop %v646
        %v650 = vmul.f32 1.0, %v649
        %v651 = vmul.f32 %v648, 2.0
        %v652 = vmul.f32 %v650, 2.0
        %v655 = vcombine.low %v651, %v652
        %657 = vst [vmem:[%s272] sm:$0xff] %v655
        %s658 = sand.u32 %s181, 1
        %s659 = scalar_lea.sflag [#allocation3], %s658
        %s660 = sand.u32 %s181, 1
        %s661 = smul.addr %s660, 8
        %s662 = scalar_lea.vmem [#allocation2], %s661
        // Predicated region
        $region49: #{tpu_custom_call.1} parent=47 // pred_check
          %p663 = pneg %p191
        $region50: #{tpu_custom_call.1} parent=47 // pred_check_branch
          %665 = sbr.rel (%p663) target = $region52
        $region51: #{tpu_custom_call.1} parent=47 // pred_region
          %s666 = smul.u32 2, %s21
          %s668 = ssub.s32 128, 128
          %669 = vsyncadd %s659, %s668
          %s670 = smul.addr %s666, 64
          %s671 = scalar_lea.hbm %s7, %s670
          %s673 = sshll.u32 %s662, 4
          %s674 = int_to_ptr.vmem [resolvable:$true] %s673
          %676 = dma.vmem_to_hbm [thread:$0]  %s674, 128, %s671, %s659
        $region52: #{tpu_custom_call.1} parent=47 // pred_fallthru
          _
      $region48: #{tpu_custom_call.1} parent=5 // pred_fallthru
        _
      %p677 = scmp.le.s32.totalorder 2, %s16
      // Predicated region
      $region53: #{tpu_custom_call.1} parent=5 // pred_check
        %p678 = pneg %p677
      $region54: #{tpu_custom_call.1} parent=5 // pred_check_branch
        %680 = sbr.rel (%p678) target = $region56
      $region55: #{tpu_custom_call.1} parent=5 // pred_region
        %s681 = ssub.s32 %s16, 2
        // Predicated region
        $region57: #{tpu_custom_call.1} parent=55 // pred_check
          %p682 = pneg %p197
        $region58: #{tpu_custom_call.1} parent=55 // pred_check_branch
          %684 = sbr.rel (%p682) target = $region60
        $region59: #{tpu_custom_call.1} parent=55 // pred_region
          %s685 = sand.u32 %s182, 1
          %s686 = scalar_lea.sflag [#allocation3], %s685
          %s687 = sand.u32 %s182, 1
          %s688 = smul.addr %s687, 8
          %s689 = scalar_lea.vmem [#allocation2], %s688
          %690 = dma.done %s686, 128
        $region60: #{tpu_custom_call.1} parent=55 // pred_fallthru
          _
      $region56: #{tpu_custom_call.1} parent=5 // pred_fallthru
        _
    $region6: #{tpu_custom_call.1} parent=1 // loop_footer
      %s20 = sadd.s32 1, %s16
    $region7: #{tpu_custom_call.1} parent=1 // loop_footer_branch
      %15 = sbr.rel target = $region3
    $region8: #{tpu_custom_call.1} parent=1 // loop_exit
      _
    %691 = vsyncpa [#allocation3], 1
    %s692 = scalar_lea.sflag [#allocation3], 1
    %693 = vsyncpa %s692, 1

</llo_original>
